<compile_context>
chip_gen: v7x
topology: tpu7x:2x2x1
jax: 0.10.0
libtpu: 0.0.40
codegen_flags: <defaults>
</compile_context>

<pallas_src>
import jax
import jax.numpy as jnp
import numpy as np
from jax.experimental import pallas as pl
from jax.experimental.pallas import tpu as pltpu


# ----------------------------------------------------------------------------
# Deterministic buffer construction (mirrors musical_scale_hz + make_waves)
# ----------------------------------------------------------------------------
def musical_scale_hz(start_midi: int, stop_midi: int, n_steps: int) -> np.ndarray:
    midi = np.linspace(start_midi, stop_midi, n_steps)
    return 440.0 * 2.0 ** ((midi - 69.0) / 12.0)


def make_waves(n_samples: int, f0s: np.ndarray, samplerate: int) -> np.ndarray:
    """Return (4 * len(f0s), n_samples): sines, sawtooths, squares, triangles."""
    t = np.arange(n_samples, dtype=np.float64) / samplerate
    phase = 2.0 * np.pi * f0s[:, None] * t[None, :]
    frac = (f0s[:, None] * t[None, :]) % 1.0

    sines = np.sin(phase)
    saws = 2.0 * frac - 1.0
    squares = np.sign(np.sin(phase))
    triangles = 2.0 * np.abs(2.0 * frac - 1.0) - 1.0

    waves = np.concatenate([sines, saws, squares, triangles], axis=0)
    return waves.astype(np.float32)


# ----------------------------------------------------------------------------
# Tiling helper: largest lane-aligned sample tile that divides n_samples and
# fits the per-step VMEM budget (re-derived for v7x's 64 MiB VMEM).
# ----------------------------------------------------------------------------
def _pick_tile(total: int, requested: int, bytes_per_col: int,
               budget_bytes: int) -> int:
    tile = max(128, min(requested, total))
    tile -= tile % 128

    def ok(t):
        return t >= 128 and total % t == 0 and t % 128 == 0

    while tile >= 128 and not (ok(tile) and tile * bytes_per_col <= budget_bytes):
        tile -= 128
    if tile < 128 or not ok(tile):
        # Fall back to a single full-width tile (block == full dim is always
        # legal, handles ragged n_samples).
        return total
    return tile


# ----------------------------------------------------------------------------
# hard_choice=True: scalar-prefetch row gather (no MXU, no full-bank streaming)
# ----------------------------------------------------------------------------
def _gather_kernel(idx_ref, w_ref, o_ref):
    # idx_ref (SMEM scalar-prefetch) is consumed only by the index_maps.
    del idx_ref
    o_ref[...] = w_ref[...]          # (1, 1, tile) copy, lane-dense store


def _resonance_gather(choice2d: jax.Array, waves: jax.Array, *,
                      sample_tile: int) -> jax.Array:
    m, n_res = choice2d.shape
    n_res_w, n_samples = waves.shape
    assert n_res == n_res_w

    # Selection hoisted out of the kernel: one argmax per row, computed once.
    # (Single index on ties -> matches sparse_softmax(normalize=True) one-hot.)
    idx = jnp.argmax(choice2d, axis=-1).astype(jnp.int32)       # (M,)

    # Per-column VMEM: 2 double-buffered input rows + 2 output rows, f32.
    ts = _pick_tile(n_samples, sample_tile, bytes_per_col=4 * 4,
                    budget_bytes=40 * 1024 * 1024)

    # 3-D layout so the gathered (resonance) axis is a leading, untiled dim and
    # the last two block dims are (1, ts) == (full, multiple-of-128).
    waves3d = waves.astype(jnp.float32).reshape(n_res, 1, n_samples)

    cost = pl.CostEstimate(flops=0, transcendentals=0,
                           bytes_accessed=2 * m * n_samples * 4 + m * 4)

    out3d = pl.pallas_call(
        _gather_kernel,
        out_shape=jax.ShapeDtypeStruct((m, 1, n_samples), jnp.float32),
        grid_spec=pltpu.PrefetchScalarGridSpec(
            num_scalar_prefetch=1,
            grid=(m, n_samples // ts),
            in_specs=[
                # Data-dependent row gather via the prefetched index table.
                pl.BlockSpec((1, 1, ts), lambda i, j, idx: (idx[i], 0, j)),
            ],
            out_specs=pl.BlockSpec((1, 1, ts), lambda i, j, idx: (i, 0, j)),
        ),
        compiler_params=pltpu.CompilerParams(
            dimension_semantics=("arbitrary", "parallel")),
        cost_estimate=cost,
    )(idx, waves3d)

    return out3d.reshape(m, n_samples)


# ----------------------------------------------------------------------------
# hard_choice=False: relu(choice) @ waves, tiled matmul with f32 accumulator
# ----------------------------------------------------------------------------
def _relu_matmul_kernel(sel_ref, w_ref, o_ref, acc_ref):
    @pl.when(pl.program_id(2) == 0)
    def _init():
        acc_ref[...] = jnp.zeros_like(acc_ref)

    acc_ref[...] += jnp.dot(sel_ref[...], w_ref[...],
                            preferred_element_type=jnp.float32)

    @pl.when(pl.program_id(2) == pl.num_programs(2) - 1)
    def _store():
        o_ref[...] = acc_ref[...].astype(o_ref.dtype)


def _resonance_relu_matmul(choice2d: jax.Array, waves: jax.Array, *,
                           sample_tile: int, row_tile: int, k_tile: int,
                           compute_dtype) -> jax.Array:
    m, n_res = choice2d.shape
    _, n_samples = waves.shape
    in_bytes = jnp.dtype(compute_dtype).itemsize

    # Selection hoisted out of the kernel: relu once in the wrapper instead of
    # once per sample tile.
    sel = jnp.maximum(choice2d, 0.0).astype(compute_dtype)
    w = waves.astype(compute_dtype)

    # Row (M) tile: full rows unless M is large and cleanly divisible.
    tm = row_tile if (m > row_tile and m % row_tile == 0) else m
    # K (resonance) tile: multiple of 128, or the full contraction.
    tk = k_tile if (n_res > k_tile and n_res % k_tile == 0) else n_res

    # VMEM working set: 2x sel block (fixed) + per sample column:
    # 2x waves column + 2x output column + accumulator column.
    fixed = 2 * tm * tk * in_bytes
    per_col = 2 * tk * in_bytes + 3 * tm * 4
    ts = _pick_tile(n_samples, sample_tile, per_col,
                    40 * 1024 * 1024 - fixed)

    cost = pl.CostEstimate(
        flops=2 * m * n_res * n_samples,
        transcendentals=0,
        bytes_accessed=(m * n_res * in_bytes + n_res * n_samples * in_bytes
                        + m * n_samples * 4))
    vmem_bytes = int(min(max(fixed + per_col * ts + (4 << 20), 32 << 20),
                         64 << 20))

    out2d = pl.pallas_call(
        _relu_matmul_kernel,
        out_shape=jax.ShapeDtypeStruct((m, n_samples), jnp.float32),
        grid_spec=pltpu.PrefetchScalarGridSpec(
            num_scalar_prefetch=0,
            grid=(m // tm, n_samples // ts, n_res // tk),
            in_specs=[pl.BlockSpec((tm, tk), lambda i, j, k: (i, k)),
                      pl.BlockSpec((tk, ts), lambda i, j, k: (k, j))],
            out_specs=pl.BlockSpec((tm, ts), lambda i, j, k: (i, j)),
            scratch_shapes=[pltpu.VMEM((tm, ts), jnp.float32)]),
        compiler_params=pltpu.CompilerParams(
            dimension_semantics=("parallel", "parallel", "arbitrary"),
            vmem_limit_bytes=vmem_bytes),
        cost_estimate=cost,
    )(sel, w)
    return out2d


# ----------------------------------------------------------------------------
# Public wrapper
# ----------------------------------------------------------------------------
def resonance_forward(choice: jax.Array, waves: jax.Array, *,
                      hard_choice: bool = True,
                      sample_tile: int = 1024,
                      row_tile: int = 256,
                      k_tile: int = 512,
                      matmul_dtype=jnp.float32) -> jax.Array:
    """choice: (B, E, R) f32; waves: (R, S) -> (B, E, S) f32."""
    batch, n_events, n_res = choice.shape
    n_res_w, n_samples = waves.shape
    assert n_res == n_res_w

    m = batch * n_events
    choice2d = choice.reshape(m, n_res).astype(jnp.float32)

    if hard_choice:
        out2d = _resonance_gather(choice2d, waves, sample_tile=sample_tile)
    else:
        out2d = _resonance_relu_matmul(
            choice2d, waves, sample_tile=sample_tile, row_tile=row_tile,
            k_tile=k_tile, compute_dtype=matmul_dtype)

    return out2d.reshape(batch, n_events, n_samples)


# ----------------------------------------------------------------------------
# Reference (plain JAX) for self-check
# ----------------------------------------------------------------------------
def resonance_reference(choice, waves, hard_choice=True):
    if hard_choice:
        idx = jnp.argmax(choice, axis=-1)            # single index (ties -> first)
        return jnp.take(waves.astype(jnp.float32), idx, axis=0)
    sel = jnp.maximum(choice, 0.0)
    return jnp.einsum('ber,rs->bes', sel, waves.astype(jnp.float32))


if __name__ == "__main__":
    # Small, module-consistent shapes.
    batch, n_events = 2, 8
    n_resonances = 16            # divisible by 4 (n_steps = n_resonances // 4)
    n_samples = 2048             # exercises >1 sample tile at tile=1024
    samplerate = 22050

    f0s = musical_scale_hz(start_midi=21, stop_midi=106,
                           n_steps=n_resonances // 4)
    waves = jnp.asarray(make_waves(n_samples, f0s, samplerate))    # (R, S)

    key = jax.random.PRNGKey(0)
    choice = jax.random.normal(key, (batch, n_events, n_resonances),
                               dtype=jnp.float32)

    # 1) hard selection path: scalar-prefetch gather -> bit-exact row copy.
    out_hard = jax.block_until_ready(
        resonance_forward(choice, waves, hard_choice=True))
    ref_hard = resonance_reference(choice, waves, hard_choice=True)
    assert out_hard.shape == (batch, n_events, n_samples)
    np.testing.assert_array_equal(np.asarray(out_hard), np.asarray(ref_hard))

    # 2) relu path, f32 wave bank (loose tolerance: MXU may evaluate f32
    #    matmuls via bf16 passes depending on default matmul precision).
    out_relu = jax.block_until_ready(
        resonance_forward(choice, waves, hard_choice=False))
    ref_relu = resonance_reference(choice, waves, hard_choice=False)
    np.testing.assert_allclose(np.asarray(out_relu), np.asarray(ref_relu),
                               rtol=2e-2, atol=1e-1)

    # 3) relu path, bf16 wave bank (feedback: halves HBM traffic for the bank).
    out_bf16 = jax.block_until_ready(
        resonance_forward(choice, waves, hard_choice=False,
                          matmul_dtype=jnp.bfloat16))
    np.testing.assert_allclose(np.asarray(out_bf16), np.asarray(ref_relu),
                               rtol=5e-2, atol=1e-1)

    print("KERNEL_OK")
</pallas_src>

<mosaic_0001>
module attributes {stable_mosaic.version = 11 : i64} {
  func.func @_gather_kernel(%arg0: i32, %arg1: i32, %arg2: memref<16xi32, #tpu.memory_space<smem>>, %arg3: memref<1x1x1024xf32, #tpu.memory_space<vmem>>, %arg4: memref<1x1x1024xf32, #tpu.memory_space<vmem>>) attributes {dimension_semantics = [#tpu.dimension_semantics<arbitrary>, #tpu.dimension_semantics<parallel>], iteration_bounds = array<i64: 16, 2>, scalar_prefetch = 1 : i64, scratch_operands = 0 : i64, tpu.core_type = #tpu.core_type<tc>, window_params = [{transform_indices = @transform_0, window_bounds = array<i64: 1, 1, 1024>}, {transform_indices = @transform_1, window_bounds = array<i64: 1, 1, 1024>}]} {
    %c0 = arith.constant 0 : index
    %c0_0 = arith.constant 0 : index
    %c0_1 = arith.constant 0 : index
    %0 = vector.load %arg3[%c0, %c0_0, %c0_1] : memref<1x1x1024xf32, #tpu.memory_space<vmem>>, vector<1x1x1024xf32>
    %c0_2 = arith.constant 0 : index
    %c0_3 = arith.constant 0 : index
    %c0_4 = arith.constant 0 : index
    %1 = vector.load %arg4[%c0_2, %c0_3, %c0_4] : memref<1x1x1024xf32, #tpu.memory_space<vmem>>, vector<1x1x1024xf32>
    tpu.vector_store %arg4[%c0_2, %c0_3, %c0_4], %0 {strides = array<i32>} : memref<1x1x1024xf32, #tpu.memory_space<vmem>>, vector<1x1x1024xf32>,
    return
  }
  func.func @transform_0(%arg0: i32, %arg1: i32, %arg2: memref<16xi32, #tpu.memory_space<smem>>) -> (i32, i32, i32) {
    %0 = arith.index_cast %arg0 : i32 to index
    %1 = memref.load %arg2[%0] : memref<16xi32, #tpu.memory_space<smem>>
    %c0_i32 = arith.constant 0 : i32
    %c0_i32_0 = arith.constant 0 : i32
    return %1, %c0_i32, %arg1 : i32, i32, i32
  }
  func.func @transform_1(%arg0: i32, %arg1: i32, %arg2: memref<16xi32, #tpu.memory_space<smem>>) -> (i32, i32, i32) {
    %c0_i32 = arith.constant 0 : i32
    %c0_i32_0 = arith.constant 0 : i32
    return %arg0, %c0_i32, %arg1 : i32, i32, i32
  }
}

</mosaic_0001>

<llo_original>
// kernel: tpu_custom_call.1
$region0: #{tpu_custom_call.1}
  #allocation0 [shape = 'u32[]', space=smem, size = 0x4, offset = 0x4, fixed_abs, tag = 'smem constant byte address 0x4 - core index']
  #allocation1 [shape = 'u32[144,128]{1,0:T(1,128)}', space=vmem, size = 0x12000, scoped, tag = 'internal scratch']
  #allocation2 [shape = 's32[1]{0}', space=sflag, size = 0x4, scoped, tag = 'scoped memory for tpu_custom_call.1']
  #allocation3 [shape = 'u8[512]{0}', space=smem, size = 0x200, scoped, tag = 'prefetched SMEM operand 0']
  %s0 = inlined_call_operand.hbm [shape: s32[16], index: 0, kind: input, shape index: {}]
  %s1 = inlined_call_operand.hbm [shape: f32[16,1,2048], index: 1, kind: input, shape index: {}]
  %s2 = inlined_call_operand.hbm [shape: f32[16,1,2048], index: 2, kind: output, shape index: {}]
  %s3 = sld [smem:[#allocation0]]
  $region41: #{tpu_custom_call.1} parent=0
    _
  %s5 = ssub.s32 1, %s3
  %s6 = scalar_select 0, %s5, %s3
  %8 = dma.hbm_to_smem %s0, 16, [#allocation3], [#allocation2]
  %9 = dma.done [#allocation2], 16
  %10 = sfence
  $region1: #{tpu_custom_call.1} parent=0
    #allocation4 [shape = 'u8[8192]{0}', space=vmem, size = 0x2000, scoped, tag = 'input window, operand 1']
    #allocation5 [shape = 's32[2]{0}', space=sflag, size = 0x8, scoped, tag = 'scoped memory for tpu_custom_call.1']
    #allocation6 [shape = 's32[2]{0}', space=sflag, size = 0x8, scoped, tag = 'scoped memory for tpu_custom_call.1']
    #allocation7 [shape = 'u8[8192]{0}', space=vmem, size = 0x2000, scoped, tag = 'output window, operand 0']
    %11 = vsyncpa [#allocation5], 0
    %s12 = scalar_lea.sflag [#allocation5], 1
    %13 = vsyncpa %s12, 0
    %14 = vsyncpa [#allocation6], 0
    %s15 = scalar_lea.sflag [#allocation6], 1
    %16 = vsyncpa %s15, 0
    loop: start=0, step=1, limit=34
    $region2: #{tpu_custom_call.1} parent=1 // loop_pre_header
      _
    $region3: #{tpu_custom_call.1} parent=1 // loop_header
      %s18 = sphi 0, %s22
      %p19 = scmp.ge.s32.totalorder %s18, 34
      %s25 = sphi 0, %s37
      %s26 = sphi 0, %s33
      %s27 = sphi 0, %s25
      %s28 = sphi 0, %s26
      %s29 = sphi 0, %s27
      %s30 = sphi 0, %s28
      %s44 = sphi 0, %s46
      %s47 = sphi 0, %s44
      %s48 = sphi 0, %s47
      %s64 = sphi 0, %s48
      %s72 = sphi 0, %s74
      %s75 = sphi 0, %s72
      %s76 = sphi 0, %s75
      %s92 = sphi 0, %s76
    $region4: #{tpu_custom_call.1} parent=1 // loop_header_branch
      %21 = sbr.rel (%p19) target = $region8
    $region5: #{tpu_custom_call.1} parent=1 // loop_body
      %s23 = ssub.s32 %s18, 1
      %s24 = ssub.s32 %s18, 2
      %s31 = sadd.s32 1, %s26
      %p32 = scmp.ge.s32.totalorder %s31, 2
      %s33 = scalar_select %p32, 0, %s31
      %s34 = sadd.s32 1, %s25
      %s35 = scalar_select %p32, %s34, %s25
      %p36 = scmp.ge.s32.totalorder %s35, 16
      %s37 = scalar_select %p36, 0, %s35
      %s38 = sld [smem:[#allocation3 + %s25]]
      %s39 = sld [smem:[#allocation3 + %s37]]
      %s40 = ssub.s32 %s38, %s39
      %s41 = ssub.s32 %s26, %s33
      %s42 = sor.u32 %s40, %s41
      %p43 = scmp.eq.s32.totalorder %s42, 0
      %s45 = sadd.s32 %s44, 1
      %s46 = scalar_select %p43, %s44, %s45
      %p49 = pneg %p43
      %p50 = scmp.eq.s32.totalorder %s18, 31
      %p51 = por %p49, %p50
      %p52 = scmp.ne.s32.totalorder %s44, %s47
      %p53 = scmp.eq.s32.totalorder %s18, 0
      %p54 = por %p52, %p53
      %p55 = scmp.ne.s32.totalorder %s44, %s47
      %p56 = scmp.eq.s32.totalorder %s23, 31
      %p57 = por %p55, %p56
      %p58 = scmp.ne.s32.totalorder %s47, %s48
      %p59 = scmp.eq.s32.totalorder %s23, 0
      %p60 = por %p58, %p59
      %p61 = scmp.ne.s32.totalorder %s47, %s48
      %p62 = scmp.eq.s32.totalorder %s24, 31
      %p63 = por %p61, %p62
      %p65 = scmp.ne.s32.totalorder %s48, %s64
      %p66 = scmp.eq.s32.totalorder %s24, 0
      %p67 = por %p65, %p66
      %s68 = ssub.s32 %s25, %s37
      %s69 = ssub.s32 %s26, %s33
      %s70 = sor.u32 %s68, %s69
      %p71 = scmp.eq.s32.totalorder %s70, 0
      %s73 = sadd.s32 %s72, 1
      %s74 = scalar_select %p71, %s72, %s73
      %p77 = pneg %p71
      %p78 = scmp.eq.s32.totalorder %s18, 31
      %p79 = por %p77, %p78
      %p80 = scmp.ne.s32.totalorder %s72, %s75
      %p81 = scmp.eq.s32.totalorder %s18, 0
      %p82 = por %p80, %p81
      %p83 = scmp.ne.s32.totalorder %s72, %s75
      %p84 = scmp.eq.s32.totalorder %s23, 31
      %p85 = por %p83, %p84
      %p86 = scmp.ne.s32.totalorder %s75, %s76
      %p87 = scmp.eq.s32.totalorder %s23, 0
      %p88 = por %p86, %p87
      %p89 = scmp.ne.s32.totalorder %s75, %s76
      %p90 = scmp.eq.s32.totalorder %s24, 31
      %p91 = por %p89, %p90
      %p93 = scmp.ne.s32.totalorder %s76, %s92
      %p94 = scmp.eq.s32.totalorder %s24, 0
      %p95 = por %p93, %p94
      %p96 = scmp.le.s32.totalorder 1, %s18
      %p97 = scmp.lt.s32.totalorder %s18, 33
      %p98 = pnand %p96, %p97
      %p99 = pneg %p98
      // Predicated region
      $region9: #{tpu_custom_call.1} parent=5 // pred_check
        _
      $region10: #{tpu_custom_call.1} parent=5 // pred_check_branch
        %101 = sbr.rel (%p98) target = $region12
      $region11: #{tpu_custom_call.1} parent=5 // pred_region
        %s102 = ssub.s32 %s18, 1
      $region12: #{tpu_custom_call.1} parent=5 // pred_fallthru
        _
      %p103 = scmp.lt.s32.totalorder %s18, 32
      // Predicated region
      $region13: #{tpu_custom_call.1} parent=5 // pred_check
        %p104 = pneg %p103
      $region14: #{tpu_custom_call.1} parent=5 // pred_check_branch
        %106 = sbr.rel (%p104) target = $region16
      $region15: #{tpu_custom_call.1} parent=5 // pred_region
        // Predicated region
        $region17: #{tpu_custom_call.1} parent=15 // pred_check
          %p107 = pneg %p54
        $region18: #{tpu_custom_call.1} parent=15 // pred_check_branch
          %109 = sbr.rel (%p107) target = $region20
        $region19: #{tpu_custom_call.1} parent=15 // pred_region
          %s110 = sand.u32 %s44, 1
          %s111 = scalar_lea.sflag [#allocation5], %s110
          %s112 = sand.u32 %s44, 1
          %s113 = smul.addr %s112, 8
          %s114 = scalar_lea.vmem [#allocation4], %s113
          %s115 = sld [smem:[#allocation3 + %s25]]
          %s116 = smul.u32 8, %s26
          %s118 = ssub.s32 128, 128
          %119 = vsyncadd %s111, %s118
          %s120 = smul.addr %s115, 16
          %s121 = sadd.s32 %s116, %s120
          %s122 = smul.addr %s121, 16
          %s123 = scalar_lea.hbm %s1, %s122
          %s125 = sshll.u32 %s114, 4
          %s126 = int_to_ptr.vmem [resolvable:$true] %s125
          %128 = dma.hbm_to_vmem [thread:$0]  %s123, 128, %s126, %s111
        $region20: #{tpu_custom_call.1} parent=15 // pred_fallthru
          _
      $region16: #{tpu_custom_call.1} parent=5 // pred_fallthru
        _
      %p129 = scmp.le.s32.totalorder 1, %s18
      %p130 = scmp.lt.s32.totalorder %s18, 33
      %p131 = pnand %p129, %p130
      %p132 = pneg %p131
      // Predicated region
      $region21: #{tpu_custom_call.1} parent=5 // pred_check
        _
      $region22: #{tpu_custom_call.1} parent=5 // pred_check_branch
        %134 = sbr.rel (%p131) target = $region24
      $region23: #{tpu_custom_call.1} parent=5 // pred_region
        %s135 = ssub.s32 %s18, 1
        %s136 = sand.u32 %s47, 1
        %s137 = scalar_lea.sflag [#allocation5], %s136
        %s138 = sand.u32 %s47, 1
        %s139 = smul.addr %s138, 8
        %s140 = scalar_lea.vmem [#allocation4], %s139
        // Predicated region
        $region25: #{tpu_custom_call.1} parent=23 // pred_check
          %p141 = pneg %p60
        $region26: #{tpu_custom_call.1} parent=23 // pred_check_branch
          %143 = sbr.rel (%p141) target = $region28
        $region27: #{tpu_custom_call.1} parent=23 // pred_region
          %144 = dma.done %s137, 128
        $region28: #{tpu_custom_call.1} parent=23 // pred_fallthru
          _
        %s145 = sand.u32 %s47, 1
        %s146 = scalar_lea.sflag [#allocation5], %s145
        %s147 = sand.u32 %s47, 1
        %s148 = smul.addr %s147, 8
        %s149 = scalar_lea.vmem [#allocation4], %s148
        %p150 = pneg %p60
        %p151 = pneg %p57
        %p152 = pneg %p88
        %p153 = pneg %p85
        %s154 = sand.u32 %s75, 1
        %s155 = scalar_lea.sflag [#allocation6], %s154
        %s156 = sand.u32 %s75, 1
        %s157 = smul.addr %s156, 8
        %s158 = scalar_lea.vmem [#allocation7], %s157
        %s159 = sld [smem:[#allocation3 + %s27]]
        %s160 = smul.u32 8, %s28
        %s161 = smul.u32 8, %s28
        %v162 = vld [vmem:[%s140] sm:$0xff]
        %163 = vst [vmem:[%s158] sm:$0xff] %v162
        %s164 = sand.u32 %s75, 1
        %s165 = scalar_lea.sflag [#allocation6], %s164
        %s166 = sand.u32 %s75, 1
        %s167 = smul.addr %s166, 8
        %s168 = scalar_lea.vmem [#allocation7], %s167
        // Predicated region
        $region29: #{tpu_custom_call.1} parent=23 // pred_check
          %p169 = pneg %p85
        $region30: #{tpu_custom_call.1} parent=23 // pred_check_branch
          %171 = sbr.rel (%p169) target = $region32
        $region31: #{tpu_custom_call.1} parent=23 // pred_region
          %s172 = smul.u32 8, %s28
          %s174 = ssub.s32 128, 128
          %175 = vsyncadd %s165, %s174
          %s176 = smul.addr %s27, 16
          %s177 = sadd.s32 %s172, %s176
          %s178 = smul.addr %s177, 16
          %s179 = scalar_lea.hbm %s2, %s178
          %s181 = sshll.u32 %s168, 4
          %s182 = int_to_ptr.vmem [resolvable:$true] %s181
          %184 = dma.vmem_to_hbm [thread:$0]  %s182, 128, %s179, %s165
        $region32: #{tpu_custom_call.1} parent=23 // pred_fallthru
          _
      $region24: #{tpu_custom_call.1} parent=5 // pred_fallthru
        _
      %p185 = scmp.le.s32.totalorder 2, %s18
      // Predicated region
      $region33: #{tpu_custom_call.1} parent=5 // pred_check
        %p186 = pneg %p185
      $region34: #{tpu_custom_call.1} parent=5 // pred_check_branch
        %188 = sbr.rel (%p186) target = $region36
      $region35: #{tpu_custom_call.1} parent=5 // pred_region
        %s189 = ssub.s32 %s18, 2
        // Predicated region
        $region37: #{tpu_custom_call.1} parent=35 // pred_check
          %p190 = pneg %p91
        $region38: #{tpu_custom_call.1} parent=35 // pred_check_branch
          %192 = sbr.rel (%p190) target = $region40
        $region39: #{tpu_custom_call.1} parent=35 // pred_region
          %s193 = sand.u32 %s76, 1
          %s194 = scalar_lea.sflag [#allocation6], %s193
          %s195 = sand.u32 %s76, 1
          %s196 = smul.addr %s195, 8
          %s197 = scalar_lea.vmem [#allocation7], %s196
          %198 = dma.done %s194, 128
        $region40: #{tpu_custom_call.1} parent=35 // pred_fallthru
          _
      $region36: #{tpu_custom_call.1} parent=5 // pred_fallthru
        _
    $region6: #{tpu_custom_call.1} parent=1 // loop_footer
      %s22 = sadd.s32 1, %s18
    $region7: #{tpu_custom_call.1} parent=1 // loop_footer_branch
      %17 = sbr.rel target = $region3
    $region8: #{tpu_custom_call.1} parent=1 // loop_exit
      _
    %199 = vsyncpa [#allocation5], 1
    %s200 = scalar_lea.sflag [#allocation5], 1
    %201 = vsyncpa %s200, 1
    %202 = vsyncpa [#allocation6], 1
    %s203 = scalar_lea.sflag [#allocation6], 1
    %204 = vsyncpa %s203, 1

</llo_original>
